<compile_context>
chip_gen: v6e
topology: v6e:2x2x1
jax: 0.10.0
libtpu: 0.0.40
codegen_flags: <defaults>
</compile_context>

<pallas_src>
import functools
import math

import jax
import jax.numpy as jnp
from jax import lax
from jax.experimental import pallas as pl
from jax.experimental.pallas import tpu as pltpu

# joint_loss hyper-parameters (from the PyTorch __init__)
W1 = 0.2
W2 = 0.01
FOCAL_ALPHA = 0.3
FOCAL_GAMMA = 2.0          # == 2 -> implemented as an explicit square
SDM_LOGIT_SCALE = 2.0      # Similarity_Distribution_Matching_Loss(length=2)
SDM_EPS = 1e-8
_LOG_SDM_EPS = math.log(SDM_EPS)   # log(0 * recip + eps) for the not-same-class entries


def _joint_loss_kernel(lab_t_ref, lab_all_ref, counts_ref, scores_ref,
                       m1_ref, m2_ref, m3_ref, out_ref, *, use_bf16=False):
    """One row-tile of the joint loss.

    lab_t_ref   : (TILE_B, 1) int32   labels of this tile's rows
    lab_all_ref : (1, B)      int32   all labels (column side)
    counts_ref  : (1, B)      f32     per-column same-class counts (>= 1)
    scores_ref  : (TILE_B, C) f32     focal-loss logits for this tile's rows
    m{1,2,3}_ref: (B, D)      f32     full (un-normalized) modality features
    out_ref     : (TILE_B, 1) f32     per-row weighted loss contribution (already / B)
    """
    t = pl.program_id(0)
    tile_b = lab_t_ref.shape[0]
    b_total = lab_all_ref.shape[1]
    inv_b = 1.0 / float(b_total)

    lab_t = lab_t_ref[...]                          # (TILE_B, 1) int32
    lab_all = lab_all_ref[...]                      # (1, B) int32
    counts = counts_ref[...]                        # (1, B) f32
    scores = scores_ref[...].astype(jnp.float32)    # (TILE_B, C)

    # ---------------- Focal loss rows: alpha * (1-pt)^2 * CE ----------------
    iota_c = lax.broadcasted_iota(jnp.int32, scores.shape, 1)
    onehot = iota_c == lab_t                                            # bool (TILE_B, C)
    smax = jnp.max(scores, axis=1, keepdims=True)                       # (TILE_B, 1)
    sumexp = jnp.sum(jnp.exp(scores - smax), axis=1, keepdims=True)     # (TILE_B, 1)
    lse = smax + jnp.log(sumexp)
    tgt = jnp.sum(jnp.where(onehot, scores, 0.0), axis=1, keepdims=True)
    ce = lse - tgt                                                      # (TILE_B, 1)
    pt = jnp.exp(-ce)
    one_m_pt = 1.0 - pt
    focal_rows = FOCAL_ALPHA * (one_m_pt * one_m_pt) * ce               # (TILE_B, 1)

    # ---------------- Shared SDM log label-distribution (tile rows) ----------------
    # labels_distribute[i, j] is 1/counts[j] on the same-class entries, 0 elsewhere,
    # so its log is a select between a (1, B) log and a compile-time constant:
    mask_t = lab_t == lab_all                                           # bool (TILE_B, B)
    log_recip = jnp.log(pl.reciprocal(counts, approx=False) + SDM_EPS)  # (1, B): B logs
    logd = jnp.where(mask_t, log_recip, jnp.float32(_LOG_SDM_EPS))      # (TILE_B, B)

    # ---------------- L2 normalization (EUP rsqrt + VPU mul) ----------------
    def l2norm(x):
        x = x.astype(jnp.float32)
        return x * lax.rsqrt(jnp.sum(x * x, axis=1, keepdims=True))

    row0 = pl.multiple_of(t * tile_b, tile_b)
    rows = pl.ds(row0, tile_b)

    n1 = l2norm(m1_ref[...])
    n2 = l2norm(m2_ref[...])
    n3 = l2norm(m3_ref[...])
    n1_t = l2norm(m1_ref[rows, :])
    n2_t = l2norm(m2_ref[rows, :])
    n3_t = l2norm(m3_ref[rows, :])

    def kl_rows(a_t, b_full):
        """Per-row KL(softmax(scale * a_t @ b_full^T) || labels_distribute)."""
        if use_bf16:
            a_t = a_t.astype(jnp.bfloat16)
            b_full = b_full.astype(jnp.bfloat16)
        logits = SDM_LOGIT_SCALE * jnp.einsum(
            "ad,bd->ab", a_t, b_full, preferred_element_type=jnp.float32)  # (TILE_B, B)
        m = jnp.max(logits, axis=1, keepdims=True)
        x = logits - m
        if use_bf16:
            e = jnp.exp(x.astype(jnp.bfloat16)).astype(jnp.float32)
        else:
            e = jnp.exp(x)
        s = jnp.sum(e, axis=1, keepdims=True)
        p = e * pl.reciprocal(s, approx=False)
        # sum_j p*(logp - logd) == sum_j p*(logits - logd) - (m + log s)   (sum_j p == 1)
        return (jnp.sum(p * (logits - logd), axis=1, keepdims=True)
                - (m + jnp.log(s)))                                        # (TILE_B, 1)

    # SDM pairs: i2t uses this tile's rows of the first modality against all rows of the
    # second; t2i is the second matmul (NOT a transpose) with the roles swapped.
    rv = kl_rows(n1_t, n2) + kl_rows(n2_t, n1)    # modality1 <-> modality2
    rc = kl_rows(n2_t, n3) + kl_rows(n3_t, n2)    # modality2 <-> modality3
    vc = kl_rows(n1_t, n3) + kl_rows(n3_t, n1)    # modality1 <-> modality3

    sdm_rows = (1.0 - W1) * rv + W1 * (rc + vc) * 0.5                   # (TILE_B, 1)
    out_ref[...] = (focal_rows + W2 * sdm_rows) * inv_b


def _vmem_cap_bytes():
    try:
        return int(pltpu.get_tpu_info().vmem_capacity_bytes)
    except Exception:
        return 64 << 20   # conservative (v7x per-TensorCore)


def _estimate_vmem(B, D, C, tile_b):
    # features (+ normalized copies) + scores tile + ~9 live (TILE_B, B) f32 buffers
    return 4 * (6 * B * D + tile_b * C + 9 * tile_b * B) + (2 << 20)


def _pick_tile_b(B, D, C, budget, tile_b=None):
    if tile_b is not None:
        if B % tile_b != 0 or not (tile_b == B or tile_b % 8 == 0):
            raise ValueError(f"tile_b={tile_b} must divide B={B} and be a multiple of 8")
        return tile_b
    if _estimate_vmem(B, D, C, B) <= budget:
        return B
    for cand in (512, 384, 256, 128, 64, 32, 16, 8):
        if B % cand == 0 and _estimate_vmem(B, D, C, cand) <= budget:
            return cand
    return B  # TODO(synk): pad + mask for ragged B instead of this fallback


def joint_loss(m1, m2, m3, labels, scores, *, tile_b=None, use_bf16=False):
    """m1/m2/m3: (B, D) f32; labels: (B,) int; scores: (B, C) f32 -> scalar f32."""
    # glue: squeeze / dtype handled here
    m1 = jnp.squeeze(m1).astype(jnp.float32)
    m2 = jnp.squeeze(m2).astype(jnp.float32)
    m3 = jnp.squeeze(m3).astype(jnp.float32)
    scores = scores.astype(jnp.float32)

    B, D = m1.shape
    C = scores.shape[-1]

    lab = labels.reshape(-1).astype(jnp.int32)
    lab_col = lab.reshape(B, 1)
    lab_row = lab.reshape(1, B)
    # per-column same-class counts (cross-tile reduction, computed once outside)
    counts = jnp.sum((lab_col == lab_row).astype(jnp.float32), axis=0, keepdims=True)

    cap = _vmem_cap_bytes()
    tb = _pick_tile_b(B, D, C, int(cap * 0.6), tile_b)
    n_tiles = B // tb
    est = _estimate_vmem(B, D, C, tb)
    vmem_limit = int(min(int(cap * 0.75), max(est, 32 << 20)))

    kernel = functools.partial(_joint_loss_kernel, use_bf16=use_bf16)

    per_row = pl.pallas_call(
        kernel,
        out_shape=jax.ShapeDtypeStruct((B, 1), jnp.float32),
        grid=(n_tiles,),
        in_specs=[
            pl.BlockSpec((tb, 1), lambda i: (i, 0)),   # labels of this tile's rows
            pl.BlockSpec((1, B), lambda i: (0, 0)),    # all labels (resident)
            pl.BlockSpec((1, B), lambda i: (0, 0)),    # per-column counts (resident)
            pl.BlockSpec((tb, C), lambda i: (i, 0)),   # focal logits tile
            pl.BlockSpec((B, D), lambda i: (0, 0)),    # modality1 (resident)
            pl.BlockSpec((B, D), lambda i: (0, 0)),    # modality2 (resident)
            pl.BlockSpec((B, D), lambda i: (0, 0)),    # modality3 (resident)
        ],
        out_specs=pl.BlockSpec((tb, 1), lambda i: (i, 0)),
        compiler_params=pltpu.CompilerParams(
            dimension_semantics=("parallel",),
            vmem_limit_bytes=vmem_limit,
        ),
    )(lab_col, lab_row, counts, scores, m1, m2, m3)

    return jnp.sum(per_row)


def _reference_joint_loss(m1, m2, m3, labels, scores):
    """Pure-JAX reference mirroring the PyTorch module."""
    labels2d = labels.reshape(-1, 1).astype(jnp.float32)
    logits = scores.astype(jnp.float32)

    # Focal
    logp = jax.nn.log_softmax(logits, axis=1)
    ce = -jnp.take_along_axis(logp, labels.reshape(-1, 1), axis=1)[:, 0]
    pt = jnp.exp(-ce)
    focal = jnp.mean(FOCAL_ALPHA * (1 - pt) ** FOCAL_GAMMA * ce)

    def sdm(vf, tf):
        mask = (labels2d - labels2d.T == 0).astype(jnp.float32)
        vn = vf / jnp.linalg.norm(vf, axis=1, keepdims=True)
        tn = tf / jnp.linalg.norm(tf, axis=1, keepdims=True)
        t2i = SDM_LOGIT_SCALE * (tn @ vn.T)
        i2t = t2i.T
        ld = mask / mask.sum(axis=1)          # broadcasts over last axis (torch semantics)
        logd = jnp.log(ld + SDM_EPS)

        def term(lg):
            p = jax.nn.softmax(lg, axis=1)
            return jnp.mean(jnp.sum(p * (jax.nn.log_softmax(lg, axis=1) - logd), axis=1))

        return term(i2t) + term(t2i)

    rv, rc, vc = sdm(m1, m2), sdm(m2, m3), sdm(m1, m3)
    multi = (1 - W1) * rv + W1 * (rc + vc) / 2
    return focal + W2 * multi


if __name__ == "__main__":
    key = jax.random.PRNGKey(0)
    k1, k2, k3, k4, k5, k6, k7, k8, k9, k10 = jax.random.split(key, 10)

    # Case 1: small batch, single-tile fast path (grid=(1,)).
    B, D, C = 8, 32, 4
    m1 = jax.random.normal(k1, (B, D), dtype=jnp.float32)
    m2 = jax.random.normal(k2, (B, D), dtype=jnp.float32)
    m3 = jax.random.normal(k3, (B, D), dtype=jnp.float32)
    labels = jax.random.randint(k4, (B,), 0, C, dtype=jnp.int32)
    scores = jax.random.normal(k5, (B, C), dtype=jnp.float32)

    loss = joint_loss(m1, m2, m3, labels, scores)
    jax.block_until_ready(loss)
    ref = _reference_joint_loss(m1, m2, m3, labels, scores)
    assert jnp.allclose(loss, ref, rtol=1e-4, atol=1e-5), (loss, ref)

    # Case 2: multi-tile row grid ("parallel" axis, 2 tiles of 8 rows).
    B2, D2, C2 = 16, 32, 4
    p1 = jax.random.normal(k6, (B2, D2), dtype=jnp.float32)
    p2 = jax.random.normal(k7, (B2, D2), dtype=jnp.float32)
    p3 = jax.random.normal(k8, (B2, D2), dtype=jnp.float32)
    labels2 = jax.random.randint(k9, (B2,), 0, C2, dtype=jnp.int32)
    scores2 = jax.random.normal(k10, (B2, C2), dtype=jnp.float32)

    loss2 = joint_loss(p1, p2, p3, labels2, scores2, tile_b=8)
    jax.block_until_ready(loss2)
    ref2 = _reference_joint_loss(p1, p2, p3, labels2, scores2)
    assert jnp.allclose(loss2, ref2, rtol=1e-4, atol=1e-5), (loss2, ref2)

    print("KERNEL_OK")
</pallas_src>

<mosaic_0001>
module attributes {stable_mosaic.version = 11 : i64} {
  func.func @_joint_loss_kernel(%arg0: i32, %arg1: memref<8x1xi32, #tpu.memory_space<vmem>>, %arg2: memref<1x8xi32, #tpu.memory_space<vmem>>, %arg3: memref<1x8xf32, #tpu.memory_space<vmem>>, %arg4: memref<8x4xf32, #tpu.memory_space<vmem>>, %arg5: memref<8x32xf32, #tpu.memory_space<vmem>>, %arg6: memref<8x32xf32, #tpu.memory_space<vmem>>, %arg7: memref<8x32xf32, #tpu.memory_space<vmem>>, %arg8: memref<8x1xf32, #tpu.memory_space<vmem>>) attributes {dimension_semantics = [#tpu.dimension_semantics<parallel>], iteration_bounds = array<i64: 1>, scalar_prefetch = 0 : i64, scratch_operands = 0 : i64, tpu.core_type = #tpu.core_type<tc>, window_params = [{transform_indices = @transform_0, window_bounds = array<i64: 8, 1>}, {pipeline_mode = #tpu.pipeline_mode<synchronous>, transform_indices = @transform_1, window_bounds = array<i64: 1, 8>}, {pipeline_mode = #tpu.pipeline_mode<synchronous>, transform_indices = @transform_2, window_bounds = array<i64: 1, 8>}, {transform_indices = @transform_3, window_bounds = array<i64: 8, 4>}, {pipeline_mode = #tpu.pipeline_mode<synchronous>, transform_indices = @transform_4, window_bounds = array<i64: 8, 32>}, {pipeline_mode = #tpu.pipeline_mode<synchronous>, transform_indices = @transform_5, window_bounds = array<i64: 8, 32>}, {pipeline_mode = #tpu.pipeline_mode<synchronous>, transform_indices = @transform_6, window_bounds = array<i64: 8, 32>}, {transform_indices = @transform_7, window_bounds = array<i64: 8, 1>}]} {
    %c0 = arith.constant 0 : index
    %c0_0 = arith.constant 0 : index
    %0 = vector.load %arg1[%c0, %c0_0] : memref<8x1xi32, #tpu.memory_space<vmem>>, vector<8x1xi32>
    %c0_1 = arith.constant 0 : index
    %c0_2 = arith.constant 0 : index
    %1 = vector.load %arg2[%c0_1, %c0_2] : memref<1x8xi32, #tpu.memory_space<vmem>>, vector<1x8xi32>
    %c0_3 = arith.constant 0 : index
    %c0_4 = arith.constant 0 : index
    %2 = vector.load %arg3[%c0_3, %c0_4] : memref<1x8xf32, #tpu.memory_space<vmem>>, vector<1x8xf32>
    %c0_5 = arith.constant 0 : index
    %c0_6 = arith.constant 0 : index
    %3 = vector.load %arg4[%c0_5, %c0_6] : memref<8x4xf32, #tpu.memory_space<vmem>>, vector<8x4xf32>
    %4 = tpu.iota {dimensions = array<i32: 1>} : vector<8x4xi32>
    %5 = vector.broadcast %0 : vector<8x1xi32> to vector<8x4xi32>
    %6 = arith.cmpi eq, %4, %5 : vector<8x4xi32>
    %cst = arith.constant dense<0xFF800000> : vector<8xf32>
    %7 = vector.multi_reduction <maximumf>, %3, %cst [1] : vector<8x4xf32> to vector<8xf32>
    %8 = vector.shape_cast %7 : vector<8xf32> to vector<8x1xf32>
    %9 = vector.broadcast %8 : vector<8x1xf32> to vector<8x4xf32>
    %10 = arith.subf %3, %9 : vector<8x4xf32>
    %11 = math.exp %10 : vector<8x4xf32>
    %cst_7 = arith.constant dense<0.000000e+00> : vector<8xf32>
    %12 = vector.multi_reduction <add>, %11, %cst_7 [1] : vector<8x4xf32> to vector<8xf32>
    %13 = vector.shape_cast %12 : vector<8xf32> to vector<8x1xf32>
    %14 = math.log %13 : vector<8x1xf32>
    %15 = arith.addf %8, %14 : vector<8x1xf32>
    %cst_8 = arith.constant 0.000000e+00 : f32
    %16 = vector.broadcast %cst_8 : f32 to vector<8x4xf32>
    %17 = arith.select %6, %3, %16 : vector<8x4xi1>, vector<8x4xf32>
    %cst_9 = arith.constant dense<0.000000e+00> : vector<8xf32>
    %18 = vector.multi_reduction <add>, %17, %cst_9 [1] : vector<8x4xf32> to vector<8xf32>
    %19 = vector.shape_cast %18 : vector<8xf32> to vector<8x1xf32>
    %20 = arith.subf %15, %19 : vector<8x1xf32>
    %cst_10 = arith.constant 0.000000e+00 : f32
    %21 = vector.broadcast %cst_10 : f32 to vector<8x1xf32>
    %22 = arith.subf %21, %20 : vector<8x1xf32>
    %23 = math.exp %22 : vector<8x1xf32>
    %cst_11 = arith.constant 1.000000e+00 : f32
    %24 = vector.broadcast %cst_11 : f32 to vector<8x1xf32>
    %25 = arith.subf %24, %23 : vector<8x1xf32>
    %26 = arith.mulf %25, %25 : vector<8x1xf32>
    %cst_12 = arith.constant 3.000000e-01 : f32
    %27 = vector.broadcast %cst_12 : f32 to vector<8x1xf32>
    %28 = arith.mulf %27, %26 : vector<8x1xf32>
    %29 = arith.mulf %28, %20 : vector<8x1xf32>
    %30 = vector.broadcast %0 : vector<8x1xi32> to vector<8x8xi32>
    %31 = vector.broadcast %1 : vector<1x8xi32> to vector<8x8xi32>
    %32 = arith.cmpi eq, %30, %31 : vector<8x8xi32>
    %33 = tpu.reciprocal %2 : vector<1x8xf32> -> vector<1x8xf32>
    %cst_13 = arith.constant 9.99999993E-9 : f32
    %34 = vector.broadcast %cst_13 : f32 to vector<1x8xf32>
    %35 = arith.addf %33, %34 : vector<1x8xf32>
    %36 = math.log %35 : vector<1x8xf32>
    %cst_14 = arith.constant -18.420681 : f32
    %37 = vector.shape_cast %36 : vector<1x8xf32> to vector<1x8xf32>
    %38 = vector.broadcast %37 : vector<1x8xf32> to vector<8x8xf32>
    %39 = vector.broadcast %cst_14 : f32 to vector<8x8xf32>
    %40 = arith.select %32, %38, %39 : vector<8x8xi1>, vector<8x8xf32>
    %c8_i32 = arith.constant 8 : i32
    %41 = arith.muli %arg0, %c8_i32 : i32
    %42 = tpu.assume_multiple %41, 8 : i32
    %c0_15 = arith.constant 0 : index
    %c0_16 = arith.constant 0 : index
    %43 = vector.load %arg5[%c0_15, %c0_16] : memref<8x32xf32, #tpu.memory_space<vmem>>, vector<8x32xf32>
    %44 = arith.mulf %43, %43 : vector<8x32xf32>
    %cst_17 = arith.constant dense<0.000000e+00> : vector<8xf32>
    %45 = vector.multi_reduction <add>, %44, %cst_17 [1] : vector<8x32xf32> to vector<8xf32>
    %46 = vector.shape_cast %45 : vector<8xf32> to vector<8x1xf32>
    %47 = math.rsqrt %46 : vector<8x1xf32>
    %48 = vector.broadcast %47 : vector<8x1xf32> to vector<8x32xf32>
    %49 = arith.mulf %43, %48 : vector<8x32xf32>
    %c0_18 = arith.constant 0 : index
    %c0_19 = arith.constant 0 : index
    %50 = vector.load %arg6[%c0_18, %c0_19] : memref<8x32xf32, #tpu.memory_space<vmem>>, vector<8x32xf32>
    %51 = arith.mulf %50, %50 : vector<8x32xf32>
    %cst_20 = arith.constant dense<0.000000e+00> : vector<8xf32>
    %52 = vector.multi_reduction <add>, %51, %cst_20 [1] : vector<8x32xf32> to vector<8xf32>
    %53 = vector.shape_cast %52 : vector<8xf32> to vector<8x1xf32>
    %54 = math.rsqrt %53 : vector<8x1xf32>
    %55 = vector.broadcast %54 : vector<8x1xf32> to vector<8x32xf32>
    %56 = arith.mulf %50, %55 : vector<8x32xf32>
    %c0_21 = arith.constant 0 : index
    %c0_22 = arith.constant 0 : index
    %57 = vector.load %arg7[%c0_21, %c0_22] : memref<8x32xf32, #tpu.memory_space<vmem>>, vector<8x32xf32>
    %58 = arith.mulf %57, %57 : vector<8x32xf32>
    %cst_23 = arith.constant dense<0.000000e+00> : vector<8xf32>
    %59 = vector.multi_reduction <add>, %58, %cst_23 [1] : vector<8x32xf32> to vector<8xf32>
    %60 = vector.shape_cast %59 : vector<8xf32> to vector<8x1xf32>
    %61 = math.rsqrt %60 : vector<8x1xf32>
    %62 = vector.broadcast %61 : vector<8x1xf32> to vector<8x32xf32>
    %63 = arith.mulf %57, %62 : vector<8x32xf32>
    %64 = arith.index_cast %42 : i32 to index
    %c0_24 = arith.constant 0 : index
    %65 = vector.load %arg5[%64, %c0_24] : memref<8x32xf32, #tpu.memory_space<vmem>>, vector<8x32xf32>
    %66 = arith.mulf %65, %65 : vector<8x32xf32>
    %cst_25 = arith.constant dense<0.000000e+00> : vector<8xf32>
    %67 = vector.multi_reduction <add>, %66, %cst_25 [1] : vector<8x32xf32> to vector<8xf32>
    %68 = vector.shape_cast %67 : vector<8xf32> to vector<8x1xf32>
    %69 = math.rsqrt %68 : vector<8x1xf32>
    %70 = vector.broadcast %69 : vector<8x1xf32> to vector<8x32xf32>
    %71 = arith.mulf %65, %70 : vector<8x32xf32>
    %72 = arith.index_cast %42 : i32 to index
    %c0_26 = arith.constant 0 : index
    %73 = vector.load %arg6[%72, %c0_26] : memref<8x32xf32, #tpu.memory_space<vmem>>, vector<8x32xf32>
    %74 = arith.mulf %73, %73 : vector<8x32xf32>
    %cst_27 = arith.constant dense<0.000000e+00> : vector<8xf32>
    %75 = vector.multi_reduction <add>, %74, %cst_27 [1] : vector<8x32xf32> to vector<8xf32>
    %76 = vector.shape_cast %75 : vector<8xf32> to vector<8x1xf32>
    %77 = math.rsqrt %76 : vector<8x1xf32>
    %78 = vector.broadcast %77 : vector<8x1xf32> to vector<8x32xf32>
    %79 = arith.mulf %73, %78 : vector<8x32xf32>
    %80 = arith.index_cast %42 : i32 to index
    %c0_28 = arith.constant 0 : index
    %81 = vector.load %arg7[%80, %c0_28] : memref<8x32xf32, #tpu.memory_space<vmem>>, vector<8x32xf32>
    %82 = arith.mulf %81, %81 : vector<8x32xf32>
    %cst_29 = arith.constant dense<0.000000e+00> : vector<8xf32>
    %83 = vector.multi_reduction <add>, %82, %cst_29 [1] : vector<8x32xf32> to vector<8xf32>
    %84 = vector.shape_cast %83 : vector<8xf32> to vector<8x1xf32>
    %85 = math.rsqrt %84 : vector<8x1xf32>
    %86 = vector.broadcast %85 : vector<8x1xf32> to vector<8x32xf32>
    %87 = arith.mulf %81, %86 : vector<8x32xf32>
    "tpu.trace_start"() <{level = 10 : i32, message = "ad,bd->ab"}> : () -> ()
    %cst_30 = arith.constant dense<0.000000e+00> : vector<8x8xf32>
    %88 = tpu.matmul %71, %56, %cst_30 {dimension_numbers = #tpu.dot_dimension_numbers<[1], [1], [0], [0], [0, 0, 1, 0], [], []>} : vector<8x32xf32>, vector<8x32xf32>, vector<8x8xf32> -> vector<8x8xf32>
    "tpu.trace_stop"() : () -> ()
    %cst_31 = arith.constant 2.000000e+00 : f32
    %89 = vector.broadcast %cst_31 : f32 to vector<8x8xf32>
    %90 = arith.mulf %89, %88 : vector<8x8xf32>
    %cst_32 = arith.constant dense<0xFF800000> : vector<8xf32>
    %91 = vector.multi_reduction <maximumf>, %90, %cst_32 [1] : vector<8x8xf32> to vector<8xf32>
    %92 = vector.shape_cast %91 : vector<8xf32> to vector<8x1xf32>
    %93 = vector.broadcast %92 : vector<8x1xf32> to vector<8x8xf32>
    %94 = arith.subf %90, %93 : vector<8x8xf32>
    %95 = math.exp %94 : vector<8x8xf32>
    %cst_33 = arith.constant dense<0.000000e+00> : vector<8xf32>
    %96 = vector.multi_reduction <add>, %95, %cst_33 [1] : vector<8x8xf32> to vector<8xf32>
    %97 = vector.shape_cast %96 : vector<8xf32> to vector<8x1xf32>
    %98 = tpu.reciprocal %97 : vector<8x1xf32> -> vector<8x1xf32>
    %99 = vector.broadcast %98 : vector<8x1xf32> to vector<8x8xf32>
    %100 = arith.mulf %95, %99 : vector<8x8xf32>
    %101 = arith.subf %90, %40 : vector<8x8xf32>
    %102 = arith.mulf %100, %101 : vector<8x8xf32>
    %cst_34 = arith.constant dense<0.000000e+00> : vector<8xf32>
    %103 = vector.multi_reduction <add>, %102, %cst_34 [1] : vector<8x8xf32> to vector<8xf32>
    %104 = vector.shape_cast %103 : vector<8xf32> to vector<8x1xf32>
    %105 = math.log %97 : vector<8x1xf32>
    %106 = arith.addf %92, %105 : vector<8x1xf32>
    %107 = arith.subf %104, %106 : vector<8x1xf32>
    "tpu.trace_start"() <{level = 10 : i32, message = "ad,bd->ab"}> : () -> ()
    %cst_35 = arith.constant dense<0.000000e+00> : vector<8x8xf32>
    %108 = tpu.matmul %79, %49, %cst_35 {dimension_numbers = #tpu.dot_dimension_numbers<[1], [1], [0], [0], [0, 0, 1, 0], [], []>} : vector<8x32xf32>, vector<8x32xf32>, vector<8x8xf32> -> vector<8x8xf32>
    "tpu.trace_stop"() : () -> ()
    %cst_36 = arith.constant 2.000000e+00 : f32
    %109 = vector.broadcast %cst_36 : f32 to vector<8x8xf32>
    %110 = arith.mulf %109, %108 : vector<8x8xf32>
    %cst_37 = arith.constant dense<0xFF800000> : vector<8xf32>
    %111 = vector.multi_reduction <maximumf>, %110, %cst_37 [1] : vector<8x8xf32> to vector<8xf32>
    %112 = vector.shape_cast %111 : vector<8xf32> to vector<8x1xf32>
    %113 = vector.broadcast %112 : vector<8x1xf32> to vector<8x8xf32>
    %114 = arith.subf %110, %113 : vector<8x8xf32>
    %115 = math.exp %114 : vector<8x8xf32>
    %cst_38 = arith.constant dense<0.000000e+00> : vector<8xf32>
    %116 = vector.multi_reduction <add>, %115, %cst_38 [1] : vector<8x8xf32> to vector<8xf32>
    %117 = vector.shape_cast %116 : vector<8xf32> to vector<8x1xf32>
    %118 = tpu.reciprocal %117 : vector<8x1xf32> -> vector<8x1xf32>
    %119 = vector.broadcast %118 : vector<8x1xf32> to vector<8x8xf32>
    %120 = arith.mulf %115, %119 : vector<8x8xf32>
    %121 = arith.subf %110, %40 : vector<8x8xf32>
    %122 = arith.mulf %120, %121 : vector<8x8xf32>
    %cst_39 = arith.constant dense<0.000000e+00> : vector<8xf32>
    %123 = vector.multi_reduction <add>, %122, %cst_39 [1] : vector<8x8xf32> to vector<8xf32>
    %124 = vector.shape_cast %123 : vector<8xf32> to vector<8x1xf32>
    %125 = math.log %117 : vector<8x1xf32>
    %126 = arith.addf %112, %125 : vector<8x1xf32>
    %127 = arith.subf %124, %126 : vector<8x1xf32>
    %128 = arith.addf %107, %127 : vector<8x1xf32>
    "tpu.trace_start"() <{level = 10 : i32, message = "ad,bd->ab"}> : () -> ()
    %cst_40 = arith.constant dense<0.000000e+00> : vector<8x8xf32>
    %129 = tpu.matmul %79, %63, %cst_40 {dimension_numbers = #tpu.dot_dimension_numbers<[1], [1], [0], [0], [0, 0, 1, 0], [], []>} : vector<8x32xf32>, vector<8x32xf32>, vector<8x8xf32> -> vector<8x8xf32>
    "tpu.trace_stop"() : () -> ()
    %cst_41 = arith.constant 2.000000e+00 : f32
    %130 = vector.broadcast %cst_41 : f32 to vector<8x8xf32>
    %131 = arith.mulf %130, %129 : vector<8x8xf32>
    %cst_42 = arith.constant dense<0xFF800000> : vector<8xf32>
    %132 = vector.multi_reduction <maximumf>, %131, %cst_42 [1] : vector<8x8xf32> to vector<8xf32>
    %133 = vector.shape_cast %132 : vector<8xf32> to vector<8x1xf32>
    %134 = vector.broadcast %133 : vector<8x1xf32> to vector<8x8xf32>
    %135 = arith.subf %131, %134 : vector<8x8xf32>
    %136 = math.exp %135 : vector<8x8xf32>
    %cst_43 = arith.constant dense<0.000000e+00> : vector<8xf32>
    %137 = vector.multi_reduction <add>, %136, %cst_43 [1] : vector<8x8xf32> to vector<8xf32>
    %138 = vector.shape_cast %137 : vector<8xf32> to vector<8x1xf32>
    %139 = tpu.reciprocal %138 : vector<8x1xf32> -> vector<8x1xf32>
    %140 = vector.broadcast %139 : vector<8x1xf32> to vector<8x8xf32>
    %141 = arith.mulf %136, %140 : vector<8x8xf32>
    %142 = arith.subf %131, %40 : vector<8x8xf32>
    %143 = arith.mulf %141, %142 : vector<8x8xf32>
    %cst_44 = arith.constant dense<0.000000e+00> : vector<8xf32>
    %144 = vector.multi_reduction <add>, %143, %cst_44 [1] : vector<8x8xf32> to vector<8xf32>
    %145 = vector.shape_cast %144 : vector<8xf32> to vector<8x1xf32>
    %146 = math.log %138 : vector<8x1xf32>
    %147 = arith.addf %133, %146 : vector<8x1xf32>
    %148 = arith.subf %145, %147 : vector<8x1xf32>
    "tpu.trace_start"() <{level = 10 : i32, message = "ad,bd->ab"}> : () -> ()
    %cst_45 = arith.constant dense<0.000000e+00> : vector<8x8xf32>
    %149 = tpu.matmul %87, %56, %cst_45 {dimension_numbers = #tpu.dot_dimension_numbers<[1], [1], [0], [0], [0, 0, 1, 0], [], []>} : vector<8x32xf32>, vector<8x32xf32>, vector<8x8xf32> -> vector<8x8xf32>
    "tpu.trace_stop"() : () -> ()
    %cst_46 = arith.constant 2.000000e+00 : f32
    %150 = vector.broadcast %cst_46 : f32 to vector<8x8xf32>
    %151 = arith.mulf %150, %149 : vector<8x8xf32>
    %cst_47 = arith.constant dense<0xFF800000> : vector<8xf32>
    %152 = vector.multi_reduction <maximumf>, %151, %cst_47 [1] : vector<8x8xf32> to vector<8xf32>
    %153 = vector.shape_cast %152 : vector<8xf32> to vector<8x1xf32>
    %154 = vector.broadcast %153 : vector<8x1xf32> to vector<8x8xf32>
    %155 = arith.subf %151, %154 : vector<8x8xf32>
    %156 = math.exp %155 : vector<8x8xf32>
    %cst_48 = arith.constant dense<0.000000e+00> : vector<8xf32>
    %157 = vector.multi_reduction <add>, %156, %cst_48 [1] : vector<8x8xf32> to vector<8xf32>
    %158 = vector.shape_cast %157 : vector<8xf32> to vector<8x1xf32>
    %159 = tpu.reciprocal %158 : vector<8x1xf32> -> vector<8x1xf32>
    %160 = vector.broadcast %159 : vector<8x1xf32> to vector<8x8xf32>
    %161 = arith.mulf %156, %160 : vector<8x8xf32>
    %162 = arith.subf %151, %40 : vector<8x8xf32>
    %163 = arith.mulf %161, %162 : vector<8x8xf32>
    %cst_49 = arith.constant dense<0.000000e+00> : vector<8xf32>
    %164 = vector.multi_reduction <add>, %163, %cst_49 [1] : vector<8x8xf32> to vector<8xf32>
    %165 = vector.shape_cast %164 : vector<8xf32> to vector<8x1xf32>
    %166 = math.log %158 : vector<8x1xf32>
    %167 = arith.addf %153, %166 : vector<8x1xf32>
    %168 = arith.subf %165, %167 : vector<8x1xf32>
    %169 = arith.addf %148, %168 : vector<8x1xf32>
    "tpu.trace_start"() <{level = 10 : i32, message = "ad,bd->ab"}> : () -> ()
    %cst_50 = arith.constant dense<0.000000e+00> : vector<8x8xf32>
    %170 = tpu.matmul %71, %63, %cst_50 {dimension_numbers = #tpu.dot_dimension_numbers<[1], [1], [0], [0], [0, 0, 1, 0], [], []>} : vector<8x32xf32>, vector<8x32xf32>, vector<8x8xf32> -> vector<8x8xf32>
    "tpu.trace_stop"() : () -> ()
    %cst_51 = arith.constant 2.000000e+00 : f32
    %171 = vector.broadcast %cst_51 : f32 to vector<8x8xf32>
    %172 = arith.mulf %171, %170 : vector<8x8xf32>
    %cst_52 = arith.constant dense<0xFF800000> : vector<8xf32>
    %173 = vector.multi_reduction <maximumf>, %172, %cst_52 [1] : vector<8x8xf32> to vector<8xf32>
    %174 = vector.shape_cast %173 : vector<8xf32> to vector<8x1xf32>
    %175 = vector.broadcast %174 : vector<8x1xf32> to vector<8x8xf32>
    %176 = arith.subf %172, %175 : vector<8x8xf32>
    %177 = math.exp %176 : vector<8x8xf32>
    %cst_53 = arith.constant dense<0.000000e+00> : vector<8xf32>
    %178 = vector.multi_reduction <add>, %177, %cst_53 [1] : vector<8x8xf32> to vector<8xf32>
    %179 = vector.shape_cast %178 : vector<8xf32> to vector<8x1xf32>
    %180 = tpu.reciprocal %179 : vector<8x1xf32> -> vector<8x1xf32>
    %181 = vector.broadcast %180 : vector<8x1xf32> to vector<8x8xf32>
    %182 = arith.mulf %177, %181 : vector<8x8xf32>
    %183 = arith.subf %172, %40 : vector<8x8xf32>
    %184 = arith.mulf %182, %183 : vector<8x8xf32>
    %cst_54 = arith.constant dense<0.000000e+00> : vector<8xf32>
    %185 = vector.multi_reduction <add>, %184, %cst_54 [1] : vector<8x8xf32> to vector<8xf32>
    %186 = vector.shape_cast %185 : vector<8xf32> to vector<8x1xf32>
    %187 = math.log %179 : vector<8x1xf32>
    %188 = arith.addf %174, %187 : vector<8x1xf32>
    %189 = arith.subf %186, %188 : vector<8x1xf32>
    "tpu.trace_start"() <{level = 10 : i32, message = "ad,bd->ab"}> : () -> ()
    %cst_55 = arith.constant dense<0.000000e+00> : vector<8x8xf32>
    %190 = tpu.matmul %87, %49, %cst_55 {dimension_numbers = #tpu.dot_dimension_numbers<[1], [1], [0], [0], [0, 0, 1, 0], [], []>} : vector<8x32xf32>, vector<8x32xf32>, vector<8x8xf32> -> vector<8x8xf32>
    "tpu.trace_stop"() : () -> ()
    %cst_56 = arith.constant 2.000000e+00 : f32
    %191 = vector.broadcast %cst_56 : f32 to vector<8x8xf32>
    %192 = arith.mulf %191, %190 : vector<8x8xf32>
    %cst_57 = arith.constant dense<0xFF800000> : vector<8xf32>
    %193 = vector.multi_reduction <maximumf>, %192, %cst_57 [1] : vector<8x8xf32> to vector<8xf32>
    %194 = vector.shape_cast %193 : vector<8xf32> to vector<8x1xf32>
    %195 = vector.broadcast %194 : vector<8x1xf32> to vector<8x8xf32>
    %196 = arith.subf %192, %195 : vector<8x8xf32>
    %197 = math.exp %196 : vector<8x8xf32>
    %cst_58 = arith.constant dense<0.000000e+00> : vector<8xf32>
    %198 = vector.multi_reduction <add>, %197, %cst_58 [1] : vector<8x8xf32> to vector<8xf32>
    %199 = vector.shape_cast %198 : vector<8xf32> to vector<8x1xf32>
    %200 = tpu.reciprocal %199 : vector<8x1xf32> -> vector<8x1xf32>
    %201 = vector.broadcast %200 : vector<8x1xf32> to vector<8x8xf32>
    %202 = arith.mulf %197, %201 : vector<8x8xf32>
    %203 = arith.subf %192, %40 : vector<8x8xf32>
    %204 = arith.mulf %202, %203 : vector<8x8xf32>
    %cst_59 = arith.constant dense<0.000000e+00> : vector<8xf32>
    %205 = vector.multi_reduction <add>, %204, %cst_59 [1] : vector<8x8xf32> to vector<8xf32>
    %206 = vector.shape_cast %205 : vector<8xf32> to vector<8x1xf32>
    %207 = math.log %199 : vector<8x1xf32>
    %208 = arith.addf %194, %207 : vector<8x1xf32>
    %209 = arith.subf %206, %208 : vector<8x1xf32>
    %210 = arith.addf %189, %209 : vector<8x1xf32>
    %cst_60 = arith.constant 8.000000e-01 : f32
    %211 = vector.broadcast %cst_60 : f32 to vector<8x1xf32>
    %212 = arith.mulf %211, %128 : vector<8x1xf32>
    %213 = arith.addf %169, %210 : vector<8x1xf32>
    %cst_61 = arith.constant 2.000000e-01 : f32
    %214 = vector.broadcast %cst_61 : f32 to vector<8x1xf32>
    %215 = arith.mulf %214, %213 : vector<8x1xf32>
    %cst_62 = arith.constant 5.000000e-01 : f32
    %216 = vector.broadcast %cst_62 : f32 to vector<8x1xf32>
    %217 = arith.mulf %215, %216 : vector<8x1xf32>
    %218 = arith.addf %212, %217 : vector<8x1xf32>
    %cst_63 = arith.constant 0.00999999977 : f32
    %219 = vector.broadcast %cst_63 : f32 to vector<8x1xf32>
    %220 = arith.mulf %219, %218 : vector<8x1xf32>
    %221 = arith.addf %29, %220 : vector<8x1xf32>
    %cst_64 = arith.constant 1.250000e-01 : f32
    %222 = vector.broadcast %cst_64 : f32 to vector<8x1xf32>
    %223 = arith.mulf %221, %222 : vector<8x1xf32>
    %c0_65 = arith.constant 0 : index
    %c0_66 = arith.constant 0 : index
    %224 = vector.load %arg8[%c0_65, %c0_66] : memref<8x1xf32, #tpu.memory_space<vmem>>, vector<8x1xf32>
    tpu.vector_store %arg8[%c0_65, %c0_66], %223 {strides = array<i32>} : memref<8x1xf32, #tpu.memory_space<vmem>>, vector<8x1xf32>,
    return
  }
  func.func @transform_0(%arg0: i32) -> (i32, i32) {
    %c0_i32 = arith.constant 0 : i32
    %c0_i32_0 = arith.constant 0 : i32
    return %arg0, %c0_i32 : i32, i32
  }
  func.func @transform_1(%arg0: i32) -> (i32, i32) {
    %c0_i32 = arith.constant 0 : i32
    %c0_i32_0 = arith.constant 0 : i32
    %c0_i32_1 = arith.constant 0 : i32
    return %c0_i32, %c0_i32_0 : i32, i32
  }
  func.func @transform_2(%arg0: i32) -> (i32, i32) {
    %c0_i32 = arith.constant 0 : i32
    %c0_i32_0 = arith.constant 0 : i32
    %c0_i32_1 = arith.constant 0 : i32
    return %c0_i32, %c0_i32_0 : i32, i32
  }
  func.func @transform_3(%arg0: i32) -> (i32, i32) {
    %c0_i32 = arith.constant 0 : i32
    %c0_i32_0 = arith.constant 0 : i32
    return %arg0, %c0_i32 : i32, i32
  }
  func.func @transform_4(%arg0: i32) -> (i32, i32) {
    %c0_i32 = arith.constant 0 : i32
    %c0_i32_0 = arith.constant 0 : i32
    %c0_i32_1 = arith.constant 0 : i32
    return %c0_i32, %c0_i32_0 : i32, i32
  }
  func.func @transform_5(%arg0: i32) -> (i32, i32) {
    %c0_i32 = arith.constant 0 : i32
    %c0_i32_0 = arith.constant 0 : i32
    %c0_i32_1 = arith.constant 0 : i32
    return %c0_i32, %c0_i32_0 : i32, i32
  }
  func.func @transform_6(%arg0: i32) -> (i32, i32) {
    %c0_i32 = arith.constant 0 : i32
    %c0_i32_0 = arith.constant 0 : i32
    %c0_i32_1 = arith.constant 0 : i32
    return %c0_i32, %c0_i32_0 : i32, i32
  }
  func.func @transform_7(%arg0: i32) -> (i32, i32) {
    %c0_i32 = arith.constant 0 : i32
    %c0_i32_0 = arith.constant 0 : i32
    return %arg0, %c0_i32 : i32, i32
  }
}

</mosaic_0001>

<llo_original>
// kernel: tpu_custom_call.1
$region0: #{tpu_custom_call.1}
  #allocation0 [shape = 'u32[]', space=smem, size = 0x4, offset = 0x4, fixed_abs, tag = 'smem constant byte address 0x4 - core index']
  #allocation1 [shape = 'u32[144,128]{1,0:T(1,128)}', space=vmem, size = 0x12000, scoped, tag = 'internal scratch']
  %s0 = inlined_call_operand.vmem [shape: s32[8,1], index: 0, kind: input, shape index: {}]
  %s1 = inlined_call_operand.hbm [shape: s32[1,8], index: 1, kind: input, shape index: {}]
  %s2 = inlined_call_operand.hbm [shape: f32[1,8], index: 2, kind: input, shape index: {}]
  %s3 = inlined_call_operand.vmem [shape: f32[8,4], index: 3, kind: input, shape index: {}]
  %s4 = inlined_call_operand.vmem [shape: f32[8,32], index: 4, kind: input, shape index: {}]
  %s5 = inlined_call_operand.vmem [shape: f32[8,32], index: 5, kind: input, shape index: {}]
  %s6 = inlined_call_operand.vmem [shape: f32[8,32], index: 6, kind: input, shape index: {}]
  %s7 = inlined_call_operand.vmem [shape: f32[8,1], index: 7, kind: output, shape index: {}]
  %s8 = sld [smem:[#allocation0]]
  $region46: #{tpu_custom_call.1} parent=0
    _
  %s10 = ssub.s32 1, %s8
  %s11 = scalar_select 0, %s10, %s8
  $region1: #{tpu_custom_call.1} parent=0
    #allocation2 [shape = 'u8[512]{0}', space=vmem, size = 0x400, scoped, tag = 'input window, operand 1, single buffered']
    #allocation3 [shape = 's32[1]{0}', space=sflag, size = 0x4, scoped, tag = 'scoped memory for tpu_custom_call.1']
    #allocation4 [shape = 'u8[512]{0}', space=vmem, size = 0x400, scoped, tag = 'input window, operand 2, single buffered']
    #allocation5 [shape = 's32[1]{0}', space=sflag, size = 0x4, scoped, tag = 'scoped memory for tpu_custom_call.1']
    %12 = vsyncpa [#allocation3], 0
    %13 = vsyncpa [#allocation5], 0
    // Predicated region
    $region2: #{tpu_custom_call.1} parent=1 // pred_check
      _
    $region3: #{tpu_custom_call.1} parent=1 // pred_check_branch
      %15 = sbr.rel (0) target = $region5
    $region4: #{tpu_custom_call.1} parent=1 // pred_region
      _
    $region5: #{tpu_custom_call.1} parent=1 // pred_fallthru
      _
    // Predicated region
    $region6: #{tpu_custom_call.1} parent=1 // pred_check
      _
    $region7: #{tpu_custom_call.1} parent=1 // pred_check_branch
      %17 = sbr.rel (0) target = $region9
    $region8: #{tpu_custom_call.1} parent=1 // pred_region
      %s19 = ssub.s32 16, 16
      %20 = vsyncadd [#allocation3], %s19
      %s22 = sshll.u32 [#allocation2], 4
      %s23 = int_to_ptr.vmem [resolvable:$true] %s22
      %25 = dma.hbm_to_vmem [thread:$0]  %s1, 16, %s23, [#allocation3]
    $region9: #{tpu_custom_call.1} parent=1 // pred_fallthru
      _
    // Predicated region
    $region10: #{tpu_custom_call.1} parent=1 // pred_check
      _
    $region11: #{tpu_custom_call.1} parent=1 // pred_check_branch
      %27 = sbr.rel (0) target = $region13
    $region12: #{tpu_custom_call.1} parent=1 // pred_region
      %s29 = ssub.s32 16, 16
      %30 = vsyncadd [#allocation5], %s29
      %s32 = sshll.u32 [#allocation4], 4
      %s33 = int_to_ptr.vmem [resolvable:$true] %s32
      %35 = dma.hbm_to_vmem [thread:$0]  %s2, 16, %s33, [#allocation5]
    $region13: #{tpu_custom_call.1} parent=1 // pred_fallthru
      _
    // Predicated region
    $region14: #{tpu_custom_call.1} parent=1 // pred_check
      _
    $region15: #{tpu_custom_call.1} parent=1 // pred_check_branch
      %37 = sbr.rel (0) target = $region17
    $region16: #{tpu_custom_call.1} parent=1 // pred_region
      _
    $region17: #{tpu_custom_call.1} parent=1 // pred_fallthru
      _
    // Predicated region
    $region18: #{tpu_custom_call.1} parent=1 // pred_check
      _
    $region19: #{tpu_custom_call.1} parent=1 // pred_check_branch
      %39 = sbr.rel (0) target = $region21
    $region20: #{tpu_custom_call.1} parent=1 // pred_region
      _
    $region21: #{tpu_custom_call.1} parent=1 // pred_fallthru
      _
    // Predicated region
    $region22: #{tpu_custom_call.1} parent=1 // pred_check
      _
    $region23: #{tpu_custom_call.1} parent=1 // pred_check_branch
      %41 = sbr.rel (0) target = $region25
    $region24: #{tpu_custom_call.1} parent=1 // pred_region
      _
    $region25: #{tpu_custom_call.1} parent=1 // pred_fallthru
      _
    // Predicated region
    $region26: #{tpu_custom_call.1} parent=1 // pred_check
      _
    $region27: #{tpu_custom_call.1} parent=1 // pred_check_branch
      %43 = sbr.rel (0) target = $region29
    $region28: #{tpu_custom_call.1} parent=1 // pred_region
      _
    $region29: #{tpu_custom_call.1} parent=1 // pred_fallthru
      _
    // Predicated region
    $region30: #{tpu_custom_call.1} parent=1 // pred_check
      _
    $region31: #{tpu_custom_call.1} parent=1 // pred_check_branch
      %45 = sbr.rel (0) target = $region33
    $region32: #{tpu_custom_call.1} parent=1 // pred_region
      %46 = dma.done [#allocation3], 16
    $region33: #{tpu_custom_call.1} parent=1 // pred_fallthru
      _
    // Predicated region
    $region34: #{tpu_custom_call.1} parent=1 // pred_check
      _
    $region35: #{tpu_custom_call.1} parent=1 // pred_check_branch
      %48 = sbr.rel (0) target = $region37
    $region36: #{tpu_custom_call.1} parent=1 // pred_region
      %49 = dma.done [#allocation5], 16
    $region37: #{tpu_custom_call.1} parent=1 // pred_fallthru
      _
    %v50 = vld [vmem:[%s0] sm:$0xff]
    %v51 = vld [vmem:[#allocation2] sm:$0x1]
    %v52 = vld [vmem:[#allocation4] sm:$0x1]
    %v53 = vld [vmem:[%s3] sm:$0xff]
    %v54 = vlaneseq
    %v55 = vand.u32 %v54, 127
    %56 = vset.pattern.permute.xlu0 0
    %57 = vperm.xlu0 %56, %v50
    %v58 = vpop.permute.xlu0 %57
    %vm59 = vcmp.eq.s32.totalorder %v55, %v58
    %vm60 = vcmask 31744
    %v61 = vsel %vm60, %v53, -inf
    %62 = vmax.xlane.f32.xlu0 %v61
    %v63 = vpop.xlane.xlu0 %62
    %v64 = vsub.f32 %v53, %v63
    %v65 = vmul.f32 %v64, 1.442695
    %v66 = vpow.pop %v65
    %v67 = vsel %vm60, %v66, 0.0
    %68 = vadd.xlane.f32.xlu0 %v67
    %v69 = vpop.xlane.xlu0 %68
    %v70 = vlog2.pop %v69
    %v71 = vmul.f32 %v70, 0.6931472
    %v72 = vadd.f32 %v63, %v71
    %v73 = vsel %vm59, %v53, 0.0
    %v74 = vsel %vm60, %v73, 0.0
    %75 = vadd.xlane.f32.xlu0 %v74
    %v76 = vpop.xlane.xlu0 %75
    %v77 = vsub.f32 %v72, %v76
    %v78 = vsub.f32 0.0, %v77
    %v79 = vmul.f32 %v78, 1.442695
    %v80 = vpow.pop %v79
    %v81 = vsub.f32 1.0, %v80
    %v82 = vmul.f32 %v81, %v81
    %v83 = vmul.f32 %v82, 0.3
    %v84 = vmul.f32 %v83, %v77
    %v85 = vlaneseq
    %v86 = vshrl.u32 %v85, 7
    %v87 = vsub.s32 0, %v86
    %v88 = vrot.slane %v51, %v87
    %vm89 = vcmp.eq.s32.totalorder %v58, %v88
    %v90 = vrcp.pop %v52
    %v91 = vadd.f32 %v90, 1e-08
    %v92 = vlog2.pop %v91
    %v93 = vmul.f32 %v92, 0.6931472
    %v95 = vlaneseq
    %v96 = vshrl.u32 %v95, 7
    %v97 = vsub.s32 0, %v96
    %v98 = vrot.slane %v93, %v97
    %v100 = vsel %vm89, %v98, -18.420681
    %s101 = smul.u32 0, 8
    %v102 = vld [vmem:[%s4] sm:$0xff]
    %v103 = vmul.f32 %v102, %v102
    %vm104 = vcmask 261120
    %v105 = vsel %vm104, %v103, 0.0
    %106 = vadd.xlane.f32.xlu0 %v105
    %v107 = vpop.xlane.xlu0 %106
    %v108 = vrsqrt.pop %v107
    %v109 = vmul.f32 %v102, %v108
    %v110 = vld [vmem:[%s5] sm:$0xff]
    %v111 = vmul.f32 %v110, %v110
    %v112 = vsel %vm104, %v111, 0.0
    %113 = vadd.xlane.f32.xlu0 %v112
    %v114 = vpop.xlane.xlu0 %113
    %v115 = vrsqrt.pop %v114
    %v116 = vmul.f32 %v110, %v115
    %v117 = vld [vmem:[%s6] sm:$0xff]
    %v118 = vmul.f32 %v117, %v117
    %v119 = vsel %vm104, %v118, 0.0
    %120 = vadd.xlane.f32.xlu0 %v119
    %v121 = vpop.xlane.xlu0 %120
    %v122 = vrsqrt.pop %v121
    %v123 = vmul.f32 %v117, %v122
    %s124 = scalar_lea.vmem %s4, %s101
    %v125 = vld [vmem:[%s124] sm:$0xff]
    %v126 = vmul.f32 %v125, %v125
    %v127 = vsel %vm104, %v126, 0.0
    %128 = vadd.xlane.f32.xlu0 %v127
    %v129 = vpop.xlane.xlu0 %128
    %v130 = vrsqrt.pop %v129
    %v131 = vmul.f32 %v125, %v130
    %s132 = scalar_lea.vmem %s5, %s101
    %v133 = vld [vmem:[%s132] sm:$0xff]
    %v134 = vmul.f32 %v133, %v133
    %v135 = vsel %vm104, %v134, 0.0
    %136 = vadd.xlane.f32.xlu0 %v135
    %v137 = vpop.xlane.xlu0 %136
    %v138 = vrsqrt.pop %v137
    %v139 = vmul.f32 %v133, %v138
    %s140 = scalar_lea.vmem %s6, %s101
    %v141 = vld [vmem:[%s140] sm:$0xff]
    %v142 = vmul.f32 %v141, %v141
    %v143 = vsel %vm104, %v142, 0.0
    %144 = vadd.xlane.f32.xlu0 %v143
    %v145 = vpop.xlane.xlu0 %144
    %v146 = vrsqrt.pop %v145
    %v147 = vmul.f32 %v141, %v146
    %v149 = vsel %vm104, %v131, 0
    %v152 = vsel %vm104, %v116, 0
    %154 = vmatprep.subr.mxu0 0.0
    %155 = vmatpush1.xpose.msra.mxu0 0.0
    %156 = vmatprep.subr.mxu0 0.0
    %157 = vmatpush1.xpose.msra.mxu0 0.0
    %158 = vmatprep.subr.mxu0 0.0
    %159 = vmatpush1.xpose.msra.mxu0 0.0
    %160 = vmatprep.subr.mxu0 0.0
    %161 = vmatpush1.xpose.msra.mxu0 0.0
    %162 = vmatprep.subr.mxu0 0.0
    %163 = vmatpush1.xpose.msra.mxu0 0.0
    %164 = vmatprep.subr.mxu0 0.0
    %165 = vmatpush1.xpose.msra.mxu0 0.0
    %166 = vmatprep.subr.mxu0 0.0
    %167 = vmatpush1.xpose.msra.mxu0 0.0
    %168 = vmatprep.subr.mxu0 0.0
    %169 = vmatpush1.xpose.msra.mxu0 0.0
    %170 = vmatprep.subr.mxu0 0.0
    %171 = vmatpush1.xpose.msra.mxu0 0.0
    %172 = vmatprep.subr.mxu0 0.0
    %173 = vmatpush1.xpose.msra.mxu0 0.0
    %174 = vmatprep.subr.mxu0 0.0
    %175 = vmatpush1.xpose.msra.mxu0 0.0
    %176 = vmatprep.subr.mxu0 0.0
    %177 = vmatpush1.xpose.msra.mxu0 0.0
    %178 = vmatprep.subr.mxu0 0.0
    %179 = vmatpush1.xpose.msra.mxu0 0.0
    %180 = vmatprep.subr.mxu0 0.0
    %181 = vmatpush1.xpose.msra.mxu0 0.0
    %182 = vmatprep.subr.mxu0 0.0
    %183 = vmatpush1.xpose.msra.mxu0 0.0
    %184 = vmatprep.subr.mxu0 0.0
    %185 = vmatpush1.xpose.msra.mxu0 %v152
    %186 = vmatprep.subr.mxu0 0.0
    %187 = vmatpush2.xpose.msra.mxu0 0.0
    %188 = vmatprep.subr.mxu0 0.0
    %189 = vmatpush2.xpose.msra.mxu0 0.0
    %190 = vmatprep.subr.mxu0 0.0
    %191 = vmatpush2.xpose.msra.mxu0 0.0
    %192 = vmatprep.subr.mxu0 0.0
    %193 = vmatpush2.xpose.msra.mxu0 0.0
    %194 = vmatprep.subr.mxu0 0.0
    %195 = vmatpush2.xpose.msra.mxu0 0.0
    %196 = vmatprep.subr.mxu0 0.0
    %197 = vmatpush2.xpose.msra.mxu0 0.0
    %198 = vmatprep.subr.mxu0 0.0
    %199 = vmatpush2.xpose.msra.mxu0 0.0
    %200 = vmatprep.subr.mxu0 0.0
    %201 = vmatpush2.xpose.msra.mxu0 0.0
    %202 = vmatprep.subr.mxu0 0.0
    %203 = vmatpush2.xpose.msra.mxu0 0.0
    %204 = vmatprep.subr.mxu0 0.0
    %205 = vmatpush2.xpose.msra.mxu0 0.0
    %206 = vmatprep.subr.mxu0 0.0
    %207 = vmatpush2.xpose.msra.mxu0 0.0
    %208 = vmatprep.subr.mxu0 0.0
    %209 = vmatpush2.xpose.msra.mxu0 0.0
    %210 = vmatprep.subr.mxu0 0.0
    %211 = vmatpush2.xpose.msra.mxu0 0.0
    %212 = vmatprep.subr.mxu0 0.0
    %213 = vmatpush2.xpose.msra.mxu0 0.0
    %214 = vmatprep.subr.mxu0 0.0
    %215 = vmatpush2.xpose.msra.mxu0 0.0
    %216 = vmatprep.subr.mxu0 0.0
    %217 = vmatpush2.xpose.msra.mxu0 0.0
    %218 = vmatprep.mubr.f32.mxu0 0.0
    %219 = vmatmul.mubr.f32.gmra.mxu0 %v149
    %v220 = vpop.f32.mrf.mxu0
    %v221 = vadd.f32 0.0, %v220
    %v222 = vpop.f32.mrf.mxu0
    %223 = vdwg.mxu0
    %v224 = vmul.f32 %v221, 2.0
    %vm225 = vcmask 64512
    %v226 = vsel %vm225, %v224, -inf
    %227 = vmax.xlane.f32.xlu0 %v226
    %v228 = vpop.xlane.xlu0 %227
    %v229 = vsub.f32 %v224, %v228
    %v230 = vmul.f32 %v229, 1.442695
    %v231 = vpow.pop %v230
    %v232 = vsel %vm225, %v231, 0.0
    %233 = vadd.xlane.f32.xlu0 %v232
    %v234 = vpop.xlane.xlu0 %233
    %v235 = vrcp.pop %v234
    %v236 = vmul.f32 %v231, %v235
    %v237 = vsub.f32 %v224, %v100
    %v238 = vmul.f32 %v236, %v237
    %v239 = vsel %vm225, %v238, 0.0
    %240 = vadd.xlane.f32.xlu0 %v239
    %v241 = vpop.xlane.xlu0 %240
    %v242 = vlog2.pop %v234
    %v243 = vmul.f32 %v242, 0.6931472
    %v244 = vadd.f32 %v228, %v243
    %v245 = vsub.f32 %v241, %v244
    %v247 = vsel %vm104, %v139, 0
    %v250 = vsel %vm104, %v109, 0
    %252 = vmatprep.subr.mxu0 0.0
    %253 = vmatpush1.xpose.msra.mxu0 0.0
    %254 = vmatprep.subr.mxu0 0.0
    %255 = vmatpush1.xpose.msra.mxu0 0.0
    %256 = vmatprep.subr.mxu0 0.0
    %257 = vmatpush1.xpose.msra.mxu0 0.0
    %258 = vmatprep.subr.mxu0 0.0
    %259 = vmatpush1.xpose.msra.mxu0 0.0
    %260 = vmatprep.subr.mxu0 0.0
    %261 = vmatpush1.xpose.msra.mxu0 0.0
    %262 = vmatprep.subr.mxu0 0.0
    %263 = vmatpush1.xpose.msra.mxu0 0.0
    %264 = vmatprep.subr.mxu0 0.0
    %265 = vmatpush1.xpose.msra.mxu0 0.0
    %266 = vmatprep.subr.mxu0 0.0
    %267 = vmatpush1.xpose.msra.mxu0 0.0
    %268 = vmatprep.subr.mxu0 0.0
    %269 = vmatpush1.xpose.msra.mxu0 0.0
    %270 = vmatprep.subr.mxu0 0.0
    %271 = vmatpush1.xpose.msra.mxu0 0.0
    %272 = vmatprep.subr.mxu0 0.0
    %273 = vmatpush1.xpose.msra.mxu0 0.0
    %274 = vmatprep.subr.mxu0 0.0
    %275 = vmatpush1.xpose.msra.mxu0 0.0
    %276 = vmatprep.subr.mxu0 0.0
    %277 = vmatpush1.xpose.msra.mxu0 0.0
    %278 = vmatprep.subr.mxu0 0.0
    %279 = vmatpush1.xpose.msra.mxu0 0.0
    %280 = vmatprep.subr.mxu0 0.0
    %281 = vmatpush1.xpose.msra.mxu0 0.0
    %282 = vmatprep.subr.mxu0 0.0
    %283 = vmatpush1.xpose.msra.mxu0 %v250
    %284 = vmatprep.subr.mxu0 0.0
    %285 = vmatpush2.xpose.msra.mxu0 0.0
    %286 = vmatprep.subr.mxu0 0.0
    %287 = vmatpush2.xpose.msra.mxu0 0.0
    %288 = vmatprep.subr.mxu0 0.0
    %289 = vmatpush2.xpose.msra.mxu0 0.0
    %290 = vmatprep.subr.mxu0 0.0
    %291 = vmatpush2.xpose.msra.mxu0 0.0
    %292 = vmatprep.subr.mxu0 0.0
    %293 = vmatpush2.xpose.msra.mxu0 0.0
    %294 = vmatprep.subr.mxu0 0.0
    %295 = vmatpush2.xpose.msra.mxu0 0.0
    %296 = vmatprep.subr.mxu0 0.0
    %297 = vmatpush2.xpose.msra.mxu0 0.0
    %298 = vmatprep.subr.mxu0 0.0
    %299 = vmatpush2.xpose.msra.mxu0 0.0
    %300 = vmatprep.subr.mxu0 0.0
    %301 = vmatpush2.xpose.msra.mxu0 0.0
    %302 = vmatprep.subr.mxu0 0.0
    %303 = vmatpush2.xpose.msra.mxu0 0.0
    %304 = vmatprep.subr.mxu0 0.0
    %305 = vmatpush2.xpose.msra.mxu0 0.0
    %306 = vmatprep.subr.mxu0 0.0
    %307 = vmatpush2.xpose.msra.mxu0 0.0
    %308 = vmatprep.subr.mxu0 0.0
    %309 = vmatpush2.xpose.msra.mxu0 0.0
    %310 = vmatprep.subr.mxu0 0.0
    %311 = vmatpush2.xpose.msra.mxu0 0.0
    %312 = vmatprep.subr.mxu0 0.0
    %313 = vmatpush2.xpose.msra.mxu0 0.0
    %314 = vmatprep.subr.mxu0 0.0
    %315 = vmatpush2.xpose.msra.mxu0 0.0
    %316 = vmatprep.mubr.f32.mxu0 0.0
    %317 = vmatmul.mubr.f32.gmra.mxu0 %v247
    %v318 = vpop.f32.mrf.mxu0
    %v319 = vadd.f32 0.0, %v318
    %v320 = vpop.f32.mrf.mxu0
    %321 = vdwg.mxu0
    %v322 = vmul.f32 %v319, 2.0
    %v323 = vsel %vm225, %v322, -inf
    %324 = vmax.xlane.f32.xlu0 %v323
    %v325 = vpop.xlane.xlu0 %324
    %v326 = vsub.f32 %v322, %v325
    %v327 = vmul.f32 %v326, 1.442695
    %v328 = vpow.pop %v327
    %v329 = vsel %vm225, %v328, 0.0
    %330 = vadd.xlane.f32.xlu0 %v329
    %v331 = vpop.xlane.xlu0 %330
    %v332 = vrcp.pop %v331
    %v333 = vmul.f32 %v328, %v332
    %v334 = vsub.f32 %v322, %v100
    %v335 = vmul.f32 %v333, %v334
    %v336 = vsel %vm225, %v335, 0.0
    %337 = vadd.xlane.f32.xlu0 %v336
    %v338 = vpop.xlane.xlu0 %337
    %v339 = vlog2.pop %v331
    %v340 = vmul.f32 %v339, 0.6931472
    %v341 = vadd.f32 %v325, %v340
    %v342 = vsub.f32 %v338, %v341
    %v343 = vadd.f32 %v245, %v342
    %v345 = vsel %vm104, %v123, 0
    %347 = vmatprep.subr.mxu0 0.0
    %348 = vmatpush1.xpose.msra.mxu0 0.0
    %349 = vmatprep.subr.mxu0 0.0
    %350 = vmatpush1.xpose.msra.mxu0 0.0
    %351 = vmatprep.subr.mxu0 0.0
    %352 = vmatpush1.xpose.msra.mxu0 0.0
    %353 = vmatprep.subr.mxu0 0.0
    %354 = vmatpush1.xpose.msra.mxu0 0.0
    %355 = vmatprep.subr.mxu0 0.0
    %356 = vmatpush1.xpose.msra.mxu0 0.0
    %357 = vmatprep.subr.mxu0 0.0
    %358 = vmatpush1.xpose.msra.mxu0 0.0
    %359 = vmatprep.subr.mxu0 0.0
    %360 = vmatpush1.xpose.msra.mxu0 0.0
    %361 = vmatprep.subr.mxu0 0.0
    %362 = vmatpush1.xpose.msra.mxu0 0.0
    %363 = vmatprep.subr.mxu0 0.0
    %364 = vmatpush1.xpose.msra.mxu0 0.0
    %365 = vmatprep.subr.mxu0 0.0
    %366 = vmatpush1.xpose.msra.mxu0 0.0
    %367 = vmatprep.subr.mxu0 0.0
    %368 = vmatpush1.xpose.msra.mxu0 0.0
    %369 = vmatprep.subr.mxu0 0.0
    %370 = vmatpush1.xpose.msra.mxu0 0.0
    %371 = vmatprep.subr.mxu0 0.0
    %372 = vmatpush1.xpose.msra.mxu0 0.0
    %373 = vmatprep.subr.mxu0 0.0
    %374 = vmatpush1.xpose.msra.mxu0 0.0
    %375 = vmatprep.subr.mxu0 0.0
    %376 = vmatpush1.xpose.msra.mxu0 0.0
    %377 = vmatprep.subr.mxu0 0.0
    %378 = vmatpush1.xpose.msra.mxu0 %v345
    %379 = vmatprep.subr.mxu0 0.0
    %380 = vmatpush2.xpose.msra.mxu0 0.0
    %381 = vmatprep.subr.mxu0 0.0
    %382 = vmatpush2.xpose.msra.mxu0 0.0
    %383 = vmatprep.subr.mxu0 0.0
    %384 = vmatpush2.xpose.msra.mxu0 0.0
    %385 = vmatprep.subr.mxu0 0.0
    %386 = vmatpush2.xpose.msra.mxu0 0.0
    %387 = vmatprep.subr.mxu0 0.0
    %388 = vmatpush2.xpose.msra.mxu0 0.0
    %389 = vmatprep.subr.mxu0 0.0
    %390 = vmatpush2.xpose.msra.mxu0 0.0
    %391 = vmatprep.subr.mxu0 0.0
    %392 = vmatpush2.xpose.msra.mxu0 0.0
    %393 = vmatprep.subr.mxu0 0.0
    %394 = vmatpush2.xpose.msra.mxu0 0.0
    %395 = vmatprep.subr.mxu0 0.0
    %396 = vmatpush2.xpose.msra.mxu0 0.0
    %397 = vmatprep.subr.mxu0 0.0
    %398 = vmatpush2.xpose.msra.mxu0 0.0
    %399 = vmatprep.subr.mxu0 0.0
    %400 = vmatpush2.xpose.msra.mxu0 0.0
    %401 = vmatprep.subr.mxu0 0.0
    %402 = vmatpush2.xpose.msra.mxu0 0.0
    %403 = vmatprep.subr.mxu0 0.0
    %404 = vmatpush2.xpose.msra.mxu0 0.0
    %405 = vmatprep.subr.mxu0 0.0
    %406 = vmatpush2.xpose.msra.mxu0 0.0
    %407 = vmatprep.subr.mxu0 0.0
    %408 = vmatpush2.xpose.msra.mxu0 0.0
    %409 = vmatprep.subr.mxu0 0.0
    %410 = vmatpush2.xpose.msra.mxu0 0.0
    %411 = vmatprep.mubr.f32.mxu0 0.0
    %412 = vmatmul.mubr.f32.gmra.mxu0 %v247
    %v413 = vpop.f32.mrf.mxu0
    %v414 = vadd.f32 0.0, %v413
    %v415 = vpop.f32.mrf.mxu0
    %416 = vdwg.mxu0
    %v417 = vmul.f32 %v414, 2.0
    %v418 = vsel %vm225, %v417, -inf
    %419 = vmax.xlane.f32.xlu0 %v418
    %v420 = vpop.xlane.xlu0 %419
    %v421 = vsub.f32 %v417, %v420
    %v422 = vmul.f32 %v421, 1.442695
    %v423 = vpow.pop %v422
    %v424 = vsel %vm225, %v423, 0.0
    %425 = vadd.xlane.f32.xlu0 %v424
    %v426 = vpop.xlane.xlu0 %425
    %v427 = vrcp.pop %v426
    %v428 = vmul.f32 %v423, %v427
    %v429 = vsub.f32 %v417, %v100
    %v430 = vmul.f32 %v428, %v429
    %v431 = vsel %vm225, %v430, 0.0
    %432 = vadd.xlane.f32.xlu0 %v431
    %v433 = vpop.xlane.xlu0 %432
    %v434 = vlog2.pop %v426
    %v435 = vmul.f32 %v434, 0.6931472
    %v436 = vadd.f32 %v420, %v435
    %v437 = vsub.f32 %v433, %v436
    %v439 = vsel %vm104, %v147, 0
    %441 = vmatprep.subr.mxu0 0.0
    %442 = vmatpush1.xpose.msra.mxu0 0.0
    %443 = vmatprep.subr.mxu0 0.0
    %444 = vmatpush1.xpose.msra.mxu0 0.0
    %445 = vmatprep.subr.mxu0 0.0
    %446 = vmatpush1.xpose.msra.mxu0 0.0
    %447 = vmatprep.subr.mxu0 0.0
    %448 = vmatpush1.xpose.msra.mxu0 0.0
    %449 = vmatprep.subr.mxu0 0.0
    %450 = vmatpush1.xpose.msra.mxu0 0.0
    %451 = vmatprep.subr.mxu0 0.0
    %452 = vmatpush1.xpose.msra.mxu0 0.0
    %453 = vmatprep.subr.mxu0 0.0
    %454 = vmatpush1.xpose.msra.mxu0 0.0
    %455 = vmatprep.subr.mxu0 0.0
    %456 = vmatpush1.xpose.msra.mxu0 0.0
    %457 = vmatprep.subr.mxu0 0.0
    %458 = vmatpush1.xpose.msra.mxu0 0.0
    %459 = vmatprep.subr.mxu0 0.0
    %460 = vmatpush1.xpose.msra.mxu0 0.0
    %461 = vmatprep.subr.mxu0 0.0
    %462 = vmatpush1.xpose.msra.mxu0 0.0
    %463 = vmatprep.subr.mxu0 0.0
    %464 = vmatpush1.xpose.msra.mxu0 0.0
    %465 = vmatprep.subr.mxu0 0.0
    %466 = vmatpush1.xpose.msra.mxu0 0.0
    %467 = vmatprep.subr.mxu0 0.0
    %468 = vmatpush1.xpose.msra.mxu0 0.0
    %469 = vmatprep.subr.mxu0 0.0
    %470 = vmatpush1.xpose.msra.mxu0 0.0
    %471 = vmatprep.subr.mxu0 0.0
    %472 = vmatpush1.xpose.msra.mxu0 %v152
    %473 = vmatprep.subr.mxu0 0.0
    %474 = vmatpush2.xpose.msra.mxu0 0.0
    %475 = vmatprep.subr.mxu0 0.0
    %476 = vmatpush2.xpose.msra.mxu0 0.0
    %477 = vmatprep.subr.mxu0 0.0
    %478 = vmatpush2.xpose.msra.mxu0 0.0
    %479 = vmatprep.subr.mxu0 0.0
    %480 = vmatpush2.xpose.msra.mxu0 0.0
    %481 = vmatprep.subr.mxu0 0.0
    %482 = vmatpush2.xpose.msra.mxu0 0.0
    %483 = vmatprep.subr.mxu0 0.0
    %484 = vmatpush2.xpose.msra.mxu0 0.0
    %485 = vmatprep.subr.mxu0 0.0
    %486 = vmatpush2.xpose.msra.mxu0 0.0
    %487 = vmatprep.subr.mxu0 0.0
    %488 = vmatpush2.xpose.msra.mxu0 0.0
    %489 = vmatprep.subr.mxu0 0.0
    %490 = vmatpush2.xpose.msra.mxu0 0.0
    %491 = vmatprep.subr.mxu0 0.0
    %492 = vmatpush2.xpose.msra.mxu0 0.0
    %493 = vmatprep.subr.mxu0 0.0
    %494 = vmatpush2.xpose.msra.mxu0 0.0
    %495 = vmatprep.subr.mxu0 0.0
    %496 = vmatpush2.xpose.msra.mxu0 0.0
    %497 = vmatprep.subr.mxu0 0.0
    %498 = vmatpush2.xpose.msra.mxu0 0.0
    %499 = vmatprep.subr.mxu0 0.0
    %500 = vmatpush2.xpose.msra.mxu0 0.0
    %501 = vmatprep.subr.mxu0 0.0
    %502 = vmatpush2.xpose.msra.mxu0 0.0
    %503 = vmatprep.subr.mxu0 0.0
    %504 = vmatpush2.xpose.msra.mxu0 0.0
    %505 = vmatprep.mubr.f32.mxu0 0.0
    %506 = vmatmul.mubr.f32.gmra.mxu0 %v439
    %v507 = vpop.f32.mrf.mxu0
    %v508 = vadd.f32 0.0, %v507
    %v509 = vpop.f32.mrf.mxu0
    %510 = vdwg.mxu0
    %v511 = vmul.f32 %v508, 2.0
    %v512 = vsel %vm225, %v511, -inf
    %513 = vmax.xlane.f32.xlu0 %v512
    %v514 = vpop.xlane.xlu0 %513
    %v515 = vsub.f32 %v511, %v514
    %v516 = vmul.f32 %v515, 1.442695
    %v517 = vpow.pop %v516
    %v518 = vsel %vm225, %v517, 0.0
    %519 = vadd.xlane.f32.xlu0 %v518
    %v520 = vpop.xlane.xlu0 %519
    %v521 = vrcp.pop %v520
    %v522 = vmul.f32 %v517, %v521
    %v523 = vsub.f32 %v511, %v100
    %v524 = vmul.f32 %v522, %v523
    %v525 = vsel %vm225, %v524, 0.0
    %526 = vadd.xlane.f32.xlu0 %v525
    %v527 = vpop.xlane.xlu0 %526
    %v528 = vlog2.pop %v520
    %v529 = vmul.f32 %v528, 0.6931472
    %v530 = vadd.f32 %v514, %v529
    %v531 = vsub.f32 %v527, %v530
    %v532 = vadd.f32 %v437, %v531
    %533 = vmatprep.subr.mxu0 0.0
    %534 = vmatpush1.xpose.msra.mxu0 0.0
    %535 = vmatprep.subr.mxu0 0.0
    %536 = vmatpush1.xpose.msra.mxu0 0.0
    %537 = vmatprep.subr.mxu0 0.0
    %538 = vmatpush1.xpose.msra.mxu0 0.0
    %539 = vmatprep.subr.mxu0 0.0
    %540 = vmatpush1.xpose.msra.mxu0 0.0
    %541 = vmatprep.subr.mxu0 0.0
    %542 = vmatpush1.xpose.msra.mxu0 0.0
    %543 = vmatprep.subr.mxu0 0.0
    %544 = vmatpush1.xpose.msra.mxu0 0.0
    %545 = vmatprep.subr.mxu0 0.0
    %546 = vmatpush1.xpose.msra.mxu0 0.0
    %547 = vmatprep.subr.mxu0 0.0
    %548 = vmatpush1.xpose.msra.mxu0 0.0
    %549 = vmatprep.subr.mxu0 0.0
    %550 = vmatpush1.xpose.msra.mxu0 0.0
    %551 = vmatprep.subr.mxu0 0.0
    %552 = vmatpush1.xpose.msra.mxu0 0.0
    %553 = vmatprep.subr.mxu0 0.0
    %554 = vmatpush1.xpose.msra.mxu0 0.0
    %555 = vmatprep.subr.mxu0 0.0
    %556 = vmatpush1.xpose.msra.mxu0 0.0
    %557 = vmatprep.subr.mxu0 0.0
    %558 = vmatpush1.xpose.msra.mxu0 0.0
    %559 = vmatprep.subr.mxu0 0.0
    %560 = vmatpush1.xpose.msra.mxu0 0.0
    %561 = vmatprep.subr.mxu0 0.0
    %562 = vmatpush1.xpose.msra.mxu0 0.0
    %563 = vmatprep.subr.mxu0 0.0
    %564 = vmatpush1.xpose.msra.mxu0 %v345
    %565 = vmatprep.subr.mxu0 0.0
    %566 = vmatpush2.xpose.msra.mxu0 0.0
    %567 = vmatprep.subr.mxu0 0.0
    %568 = vmatpush2.xpose.msra.mxu0 0.0
    %569 = vmatprep.subr.mxu0 0.0
    %570 = vmatpush2.xpose.msra.mxu0 0.0
    %571 = vmatprep.subr.mxu0 0.0
    %572 = vmatpush2.xpose.msra.mxu0 0.0
    %573 = vmatprep.subr.mxu0 0.0
    %574 = vmatpush2.xpose.msra.mxu0 0.0
    %575 = vmatprep.subr.mxu0 0.0
    %576 = vmatpush2.xpose.msra.mxu0 0.0
    %577 = vmatprep.subr.mxu0 0.0
    %578 = vmatpush2.xpose.msra.mxu0 0.0
    %579 = vmatprep.subr.mxu0 0.0
    %580 = vmatpush2.xpose.msra.mxu0 0.0
    %581 = vmatprep.subr.mxu0 0.0
    %582 = vmatpush2.xpose.msra.mxu0 0.0
    %583 = vmatprep.subr.mxu0 0.0
    %584 = vmatpush2.xpose.msra.mxu0 0.0
    %585 = vmatprep.subr.mxu0 0.0
    %586 = vmatpush2.xpose.msra.mxu0 0.0
    %587 = vmatprep.subr.mxu0 0.0
    %588 = vmatpush2.xpose.msra.mxu0 0.0
    %589 = vmatprep.subr.mxu0 0.0
    %590 = vmatpush2.xpose.msra.mxu0 0.0
    %591 = vmatprep.subr.mxu0 0.0
    %592 = vmatpush2.xpose.msra.mxu0 0.0
    %593 = vmatprep.subr.mxu0 0.0
    %594 = vmatpush2.xpose.msra.mxu0 0.0
    %595 = vmatprep.subr.mxu0 0.0
    %596 = vmatpush2.xpose.msra.mxu0 0.0
    %597 = vmatprep.mubr.f32.mxu0 0.0
    %598 = vmatmul.mubr.f32.gmra.mxu0 %v149
    %v599 = vpop.f32.mrf.mxu0
    %v600 = vadd.f32 0.0, %v599
    %v601 = vpop.f32.mrf.mxu0
    %602 = vdwg.mxu0
    %v603 = vmul.f32 %v600, 2.0
    %v604 = vsel %vm225, %v603, -inf
    %605 = vmax.xlane.f32.xlu0 %v604
    %v606 = vpop.xlane.xlu0 %605
    %v607 = vsub.f32 %v603, %v606
    %v608 = vmul.f32 %v607, 1.442695
    %v609 = vpow.pop %v608
    %v610 = vsel %vm225, %v609, 0.0
    %611 = vadd.xlane.f32.xlu0 %v610
    %v612 = vpop.xlane.xlu0 %611
    %v613 = vrcp.pop %v612
    %v614 = vmul.f32 %v609, %v613
    %v615 = vsub.f32 %v603, %v100
    %v616 = vmul.f32 %v614, %v615
    %v617 = vsel %vm225, %v616, 0.0
    %618 = vadd.xlane.f32.xlu0 %v617
    %v619 = vpop.xlane.xlu0 %618
    %v620 = vlog2.pop %v612
    %v621 = vmul.f32 %v620, 0.6931472
    %v622 = vadd.f32 %v606, %v621
    %v623 = vsub.f32 %v619, %v622
    %624 = vmatprep.subr.mxu0 0.0
    %625 = vmatpush1.xpose.msra.mxu0 0.0
    %626 = vmatprep.subr.mxu0 0.0
    %627 = vmatpush1.xpose.msra.mxu0 0.0
    %628 = vmatprep.subr.mxu0 0.0
    %629 = vmatpush1.xpose.msra.mxu0 0.0
    %630 = vmatprep.subr.mxu0 0.0
    %631 = vmatpush1.xpose.msra.mxu0 0.0
    %632 = vmatprep.subr.mxu0 0.0
    %633 = vmatpush1.xpose.msra.mxu0 0.0
    %634 = vmatprep.subr.mxu0 0.0
    %635 = vmatpush1.xpose.msra.mxu0 0.0
    %636 = vmatprep.subr.mxu0 0.0
    %637 = vmatpush1.xpose.msra.mxu0 0.0
    %638 = vmatprep.subr.mxu0 0.0
    %639 = vmatpush1.xpose.msra.mxu0 0.0
    %640 = vmatprep.subr.mxu0 0.0
    %641 = vmatpush1.xpose.msra.mxu0 0.0
    %642 = vmatprep.subr.mxu0 0.0
    %643 = vmatpush1.xpose.msra.mxu0 0.0
    %644 = vmatprep.subr.mxu0 0.0
    %645 = vmatpush1.xpose.msra.mxu0 0.0
    %646 = vmatprep.subr.mxu0 0.0
    %647 = vmatpush1.xpose.msra.mxu0 0.0
    %648 = vmatprep.subr.mxu0 0.0
    %649 = vmatpush1.xpose.msra.mxu0 0.0
    %650 = vmatprep.subr.mxu0 0.0
    %651 = vmatpush1.xpose.msra.mxu0 0.0
    %652 = vmatprep.subr.mxu0 0.0
    %653 = vmatpush1.xpose.msra.mxu0 0.0
    %654 = vmatprep.subr.mxu0 0.0
    %655 = vmatpush1.xpose.msra.mxu0 %v250
    %656 = vmatprep.subr.mxu0 0.0
    %657 = vmatpush2.xpose.msra.mxu0 0.0
    %658 = vmatprep.subr.mxu0 0.0
    %659 = vmatpush2.xpose.msra.mxu0 0.0
    %660 = vmatprep.subr.mxu0 0.0
    %661 = vmatpush2.xpose.msra.mxu0 0.0
    %662 = vmatprep.subr.mxu0 0.0
    %663 = vmatpush2.xpose.msra.mxu0 0.0
    %664 = vmatprep.subr.mxu0 0.0
    %665 = vmatpush2.xpose.msra.mxu0 0.0
    %666 = vmatprep.subr.mxu0 0.0
    %667 = vmatpush2.xpose.msra.mxu0 0.0
    %668 = vmatprep.subr.mxu0 0.0
    %669 = vmatpush2.xpose.msra.mxu0 0.0
    %670 = vmatprep.subr.mxu0 0.0
    %671 = vmatpush2.xpose.msra.mxu0 0.0
    %672 = vmatprep.subr.mxu0 0.0
    %673 = vmatpush2.xpose.msra.mxu0 0.0
    %674 = vmatprep.subr.mxu0 0.0
    %675 = vmatpush2.xpose.msra.mxu0 0.0
    %676 = vmatprep.subr.mxu0 0.0
    %677 = vmatpush2.xpose.msra.mxu0 0.0
    %678 = vmatprep.subr.mxu0 0.0
    %679 = vmatpush2.xpose.msra.mxu0 0.0
    %680 = vmatprep.subr.mxu0 0.0
    %681 = vmatpush2.xpose.msra.mxu0 0.0
    %682 = vmatprep.subr.mxu0 0.0
    %683 = vmatpush2.xpose.msra.mxu0 0.0
    %684 = vmatprep.subr.mxu0 0.0
    %685 = vmatpush2.xpose.msra.mxu0 0.0
    %686 = vmatprep.subr.mxu0 0.0
    %687 = vmatpush2.xpose.msra.mxu0 0.0
    %688 = vmatprep.mubr.f32.mxu0 0.0
    %689 = vmatmul.mubr.f32.gmra.mxu0 %v439
    %v690 = vpop.f32.mrf.mxu0
    %v691 = vadd.f32 0.0, %v690
    %v692 = vpop.f32.mrf.mxu0
    %693 = vdwg.mxu0
    %v694 = vmul.f32 %v691, 2.0
    %v695 = vsel %vm225, %v694, -inf
    %696 = vmax.xlane.f32.xlu0 %v695
    %v697 = vpop.xlane.xlu0 %696
    %v698 = vsub.f32 %v694, %v697
    %v699 = vmul.f32 %v698, 1.442695
    %v700 = vpow.pop %v699
    %v701 = vsel %vm225, %v700, 0.0
    %702 = vadd.xlane.f32.xlu0 %v701
    %v703 = vpop.xlane.xlu0 %702
    %v704 = vrcp.pop %v703
    %v705 = vmul.f32 %v700, %v704
    %v706 = vsub.f32 %v694, %v100
    %v707 = vmul.f32 %v705, %v706
    %v708 = vsel %vm225, %v707, 0.0
    %709 = vadd.xlane.f32.xlu0 %v708
    %v710 = vpop.xlane.xlu0 %709
    %v711 = vlog2.pop %v703
    %v712 = vmul.f32 %v711, 0.6931472
    %v713 = vadd.f32 %v697, %v712
    %v714 = vsub.f32 %v710, %v713
    %v715 = vadd.f32 %v623, %v714
    %v716 = vmul.f32 %v343, 0.8
    %v717 = vadd.f32 %v532, %v715
    %v718 = vmul.f32 %v717, 0.2
    %v719 = vmul.f32 %v718, 0.5
    %v720 = vadd.f32 %v716, %v719
    %v721 = vmul.f32 %v720, 0.01
    %v722 = vadd.f32 %v84, %v721
    %v723 = vmul.f32 %v722, 0.125
    %vm724 = vcmask 7168
    %725 = vst.msk [vmem:[%s7] sm:$0xff] %vm724, %v723
    // Predicated region
    $region38: #{tpu_custom_call.1} parent=1 // pred_check
      _
    $region39: #{tpu_custom_call.1} parent=1 // pred_check_branch
      %727 = sbr.rel (0) target = $region41
    $region40: #{tpu_custom_call.1} parent=1 // pred_region
      _
    $region41: #{tpu_custom_call.1} parent=1 // pred_fallthru
      _
    // Predicated region
    $region42: #{tpu_custom_call.1} parent=1 // pred_check
      _
    $region43: #{tpu_custom_call.1} parent=1 // pred_check_branch
      %729 = sbr.rel (0) target = $region45
    $region44: #{tpu_custom_call.1} parent=1 // pred_region
      _
    $region45: #{tpu_custom_call.1} parent=1 // pred_fallthru
      _
    %730 = vsyncpa [#allocation3], 1
    %731 = vsyncpa [#allocation5], 1

</llo_original>
